<compile_context>
chip_gen: v7x
topology: tpu7x:2x2x1
jax: 0.10.0
libtpu: 0.0.40
codegen_flags: <defaults>
</compile_context>

<pallas_src>
import functools
import math

import jax
import jax.numpy as jnp
from jax.experimental import pallas as pl
from jax.experimental.pallas import tpu as pltpu


def _round_up(x, m):
    return (x + m - 1) // m * m


def _residual_net_kernel(x_ref, w0_ref, b0_ref,
                         g1_ref, be1_ref, w1_ref,
                         g2_ref, be2_ref, w2_ref, bb2_ref,
                         wf_ref, bf_ref, o_ref, h_ref, *, n_valid):
    i = pl.program_id(0)
    eps = jnp.float32(1e-5)
    n_pad = h_ref.shape[0]
    inv_n = jnp.float32(1.0 / n_valid)
    needs_mask = (n_valid != n_pad)   # static at trace time

    if needs_mask:
        row_ids = jax.lax.broadcasted_iota(jnp.int32, (n_pad, 1), 0)
        mask = (row_ids < n_valid).astype(jnp.float32)

    def mm(a_f32, w_bf16):
        # bf16 operands into the MXU, f32 accumulation.
        return jnp.dot(a_f32.astype(jnp.bfloat16), w_bf16,
                       preferred_element_type=jnp.float32)

    def bn_relu(a, gamma, beta):
        # Training-mode BatchNorm1d (batch stats, biased var) with the affine
        # folded into a single scale/shift, followed by ReLU. Variance is
        # computed centered to avoid E[x^2]-E[x]^2 cancellation; padded rows
        # are excluded from the stats via a layout-regular row mask.
        am = a * mask if needs_mask else a
        mean = jnp.sum(am, axis=0, keepdims=True) * inv_n
        c = a - mean
        if needs_mask:
            c = c * mask
        var = jnp.sum(c * c, axis=0, keepdims=True) * inv_n
        scale = jax.lax.rsqrt(var + eps) * gamma
        shift = beta - mean * scale
        return jnp.maximum(a * scale + shift, 0.0)

    @pl.when(i == 0)
    def _():
        # initial layer: x is already bf16 (host cast); (N,Din)@(Din,H) + (1,H)
        h_ref[...] = jnp.dot(x_ref[...], w0_ref[...],
                             preferred_element_type=jnp.float32) + b0_ref[...]

    h = h_ref[...]

    # ---- residual block `i` (per-block params streamed by the grid) ----
    r = bn_relu(h, g1_ref[0], be1_ref[0])
    r = mm(r, w1_ref[0])                 # fc1 bias absorbed by bn2 (exact)
    r = bn_relu(r, g2_ref[0], be2_ref[0])
    r = mm(r, w2_ref[0]) + bb2_ref[0]    # dropout(p=0.0) == identity
    h = h + r
    h_ref[...] = h

    @pl.when(i == pl.num_programs(0) - 1)
    def _():
        # final layer: (N,H) @ (H,Dout_pad) + (1,Dout_pad) -> lane-dense store
        o_ref[...] = (mm(h, wf_ref[...]) + bf_ref[...]).astype(o_ref.dtype)


def init_params(key, dim, hidden_dim, out_dim, num_blocks=2, c_dim=None):
    """Deterministic init mirroring the PyTorch module (PyTorch weight convention)."""
    in_dim = dim + c_dim if c_dim is not None else dim
    ks = jax.random.split(key, 4 + 4 * num_blocks)
    ki = iter(ks)

    def uni(k, shape, bound):
        return jax.random.uniform(k, shape, jnp.float32, -bound, bound)

    # initial layer: PyTorch Linear default init U(-1/sqrt(fan_in), 1/sqrt(fan_in))
    bnd0 = 1.0 / math.sqrt(in_dim)
    w0 = uni(next(ki), (hidden_dim, in_dim), bnd0)
    b0 = uni(next(ki), (1, hidden_dim), bnd0)

    bnd_h = 1.0 / math.sqrt(hidden_dim)
    w1, bb1, w2, bb2 = [], [], [], []
    for _ in range(num_blocks):
        w1.append(uni(next(ki), (hidden_dim, hidden_dim), bnd_h))   # fc1 default
        bb1.append(uni(next(ki), (1, hidden_dim), bnd_h))
        w2.append(uni(next(ki), (hidden_dim, hidden_dim), 0.001))   # fc2: U(-0.001, 0.001)
        bb2.append(uni(next(ki), (1, hidden_dim), 0.001))

    # BatchNorm1d affine params: gamma=1, beta=0
    g = jnp.ones((num_blocks, 1, hidden_dim), jnp.float32)
    be = jnp.zeros((num_blocks, 1, hidden_dim), jnp.float32)

    # final layer: U(-stdv, stdv), stdv = 0.01 / sqrt(hidden_dim)
    stdv = 0.01 / math.sqrt(hidden_dim)
    wf = uni(next(ki), (out_dim, hidden_dim), stdv)
    bf = uni(next(ki), (1, out_dim), stdv)

    return {
        "w0": w0, "b0": b0,
        "g1": g, "be1": be, "w1": jnp.stack(w1), "bb1": jnp.stack(bb1),
        "g2": g, "be2": be, "w2": jnp.stack(w2), "bb2": jnp.stack(bb2),
        "wf": wf, "bf": bf,
    }


def pack_params(params, *, lane=128):
    """One-time host-side repack: transpose weights to (in, out), zero-pad
    feature dims to lane multiples, cast matmul weights to bf16.

    NOTE: bb1 (fc1 bias) is intentionally NOT packed -- a Linear bias feeding
    straight into BatchNorm is absorbed into the batch mean (exact in real
    arithmetic; bit-level fp differences only)."""
    hidden_dim, in_dim = params["w0"].shape
    out_dim = params["wf"].shape[0]
    num_blocks = params["w1"].shape[0]

    in_p = _round_up(in_dim, lane)
    h_p = _round_up(hidden_dim, lane)
    out_p = _round_up(out_dim, lane)

    def pad2(a, rows, cols):
        return jnp.pad(a, ((0, rows - a.shape[0]), (0, cols - a.shape[1])))

    def pad_last(a, cols):
        return jnp.pad(a, [(0, 0)] * (a.ndim - 1) + [(0, cols - a.shape[-1])])

    def pad_stack(w, rows, cols):   # (nb, out, in) -> (nb, in_p, out_p), bf16
        wt = jnp.swapaxes(w, 1, 2)
        return jnp.pad(wt, ((0, 0), (0, rows - wt.shape[1]),
                            (0, cols - wt.shape[2]))).astype(jnp.bfloat16)

    packed = {
        "w0": pad2(params["w0"].T, in_p, h_p).astype(jnp.bfloat16),
        "b0": pad_last(params["b0"], h_p),
        "g1": pad_last(params["g1"], h_p),      # zero-padded -> padded cols stay 0
        "be1": pad_last(params["be1"], h_p),
        "w1": pad_stack(params["w1"], h_p, h_p),
        "g2": pad_last(params["g2"], h_p),
        "be2": pad_last(params["be2"], h_p),
        "w2": pad_stack(params["w2"], h_p, h_p),
        "bb2": pad_last(params["bb2"], h_p),
        "wf": pad2(params["wf"].T, h_p, out_p).astype(jnp.bfloat16),
        "bf": pad_last(params["bf"], out_p),
    }
    meta = dict(in_dim=in_dim, hidden_dim=hidden_dim, out_dim=out_dim,
                num_blocks=num_blocks, in_pad=in_p, hid_pad=h_p, out_pad=out_p)
    return packed, meta


def _vmem_limit_bytes(n_pad, in_pad, hid_pad, out_pad):
    """Footprint-derived VMEM request (+25% headroom), clamped to 3/4 of the
    chip's physical VMEM so the compiler keeps internal/pipelining slack."""
    f32, bf16 = 4, 2
    resident = (n_pad * in_pad * bf16           # x (constant index -> resident)
                + in_pad * hid_pad * bf16       # w0
                + hid_pad * f32                 # b0
                + hid_pad * out_pad * bf16      # wf
                + out_pad * f32                 # bf
                + n_pad * out_pad * f32         # output block
                + n_pad * hid_pad * f32)        # h scratch
    per_block = (2 * hid_pad * hid_pad * bf16   # w1, w2
                 + 5 * hid_pad * f32)           # g1, be1, g2, be2, bb2
    streamed = 2 * per_block                    # double-buffered weight stream
    temps = 4 * n_pad * hid_pad * f32           # r / centered / matmul temps
    limit = int((resident + streamed + temps) * 5 // 4)
    limit = max(limit, 16 * 1024 * 1024)
    try:
        phys = pltpu.get_tpu_info().vmem_capacity_bytes
    except Exception:
        phys = 64 * 1024 * 1024                 # v7x: smallest of the three
    return min(limit, int(phys) * 3 // 4)


def residual_net_forward(x, packed, meta, context=None):
    if context is not None:
        x = jnp.concatenate([x, context], axis=-1)   # glue: concat before kernel

    x_shape_org = x.shape
    if x.ndim == 3:
        x = x.reshape(-1, x.shape[-1])               # glue: flatten(0, 1)

    n = x.shape[0]
    # NOTE: for throughput, callers should fuse batches so n >= ~128 (v5e) /
    # ~256 (v6e/v7x) rows -- with tiny n the MXU is fill/drain dominated.
    n_pad = max(_round_up(n, 8), 8)
    in_pad, hid_pad, out_pad = meta["in_pad"], meta["hid_pad"], meta["out_pad"]
    nb, out_dim = meta["num_blocks"], meta["out_dim"]

    # Zero-pad batch (sublanes) / input features (lanes); cast to bf16 on the
    # host (it is cast before the MXU anyway) to halve x's DMA + VMEM.
    # BN stats in-kernel exclude padded rows, so padding is semantics-safe.
    x_p = jnp.pad(x.astype(jnp.bfloat16),
                  ((0, n_pad - n), (0, in_pad - x.shape[1])))

    args = (x_p, packed["w0"], packed["b0"],
            packed["g1"], packed["be1"], packed["w1"],
            packed["g2"], packed["be2"], packed["w2"], packed["bb2"],
            packed["wf"], packed["bf"])

    const2 = lambda i: (0, 0)       # resident across the block grid
    blk3 = lambda i: (i, 0, 0)      # streamed per residual block
    in_specs = [
        pl.BlockSpec((n_pad, in_pad), const2),        # x
        pl.BlockSpec((in_pad, hid_pad), const2),      # w0
        pl.BlockSpec((1, hid_pad), const2),           # b0
        pl.BlockSpec((1, 1, hid_pad), blk3),          # g1
        pl.BlockSpec((1, 1, hid_pad), blk3),          # be1
        pl.BlockSpec((1, hid_pad, hid_pad), blk3),    # w1
        pl.BlockSpec((1, 1, hid_pad), blk3),          # g2
        pl.BlockSpec((1, 1, hid_pad), blk3),          # be2
        pl.BlockSpec((1, hid_pad, hid_pad), blk3),    # w2
        pl.BlockSpec((1, 1, hid_pad), blk3),          # bb2
        pl.BlockSpec((hid_pad, out_pad), const2),     # wf
        pl.BlockSpec((1, out_pad), const2),           # bf
    ]
    out_specs = pl.BlockSpec((n_pad, out_pad), const2)

    flops = 2 * n_pad * (in_pad * hid_pad + nb * 2 * hid_pad * hid_pad
                         + hid_pad * out_pad)
    bytes_accessed = sum(int(a.size) * a.dtype.itemsize for a in args) \
        + n_pad * out_pad * 4
    cost = pl.CostEstimate(flops=int(flops),
                           transcendentals=int(2 * nb * hid_pad),
                           bytes_accessed=int(bytes_accessed))

    out = pl.pallas_call(
        functools.partial(_residual_net_kernel, n_valid=n),
        out_shape=jax.ShapeDtypeStruct((n_pad, out_pad), jnp.float32),
        grid_spec=pltpu.PrefetchScalarGridSpec(
            num_scalar_prefetch=0,
            grid=(nb,),
            in_specs=in_specs,
            out_specs=out_specs,
            scratch_shapes=[pltpu.VMEM((n_pad, hid_pad), jnp.float32)]),
        compiler_params=pltpu.CompilerParams(
            dimension_semantics=("arbitrary",),
            vmem_limit_bytes=_vmem_limit_bytes(n_pad, in_pad, hid_pad, out_pad)),
        cost_estimate=cost,
    )(*args)

    out = out[:n, :out_dim]                          # drop lane/sublane padding
    if len(x_shape_org) == 3:
        out = out.reshape(x_shape_org[0], x_shape_org[1], out_dim)
    return out


if __name__ == "__main__":
    dim, hidden_dim, out_dim, num_blocks = 4, 32, 3, 2
    batch = 8

    key = jax.random.PRNGKey(0)
    k_x, k_p = jax.random.split(key)
    x = jax.random.normal(k_x, (batch, dim), jnp.float32)
    params = init_params(k_p, dim, hidden_dim, out_dim, num_blocks=num_blocks)
    packed, meta = pack_params(params)

    out = residual_net_forward(x, packed, meta)
    jax.block_until_ready(out)
    assert out.shape == (batch, out_dim)
    assert bool(jnp.all(jnp.isfinite(out)))
    print("KERNEL_OK")
</pallas_src>

<mosaic_0001>
module attributes {stable_mosaic.version = 11 : i64} {
  func.func @_residual_net_kernel(%arg0: i32, %arg1: memref<8x128xbf16, #tpu.memory_space<vmem>>, %arg2: memref<128x128xbf16, #tpu.memory_space<vmem>>, %arg3: memref<1x128xf32, #tpu.memory_space<vmem>>, %arg4: memref<1x1x128xf32, #tpu.memory_space<vmem>>, %arg5: memref<1x1x128xf32, #tpu.memory_space<vmem>>, %arg6: memref<1x128x128xbf16, #tpu.memory_space<vmem>>, %arg7: memref<1x1x128xf32, #tpu.memory_space<vmem>>, %arg8: memref<1x1x128xf32, #tpu.memory_space<vmem>>, %arg9: memref<1x128x128xbf16, #tpu.memory_space<vmem>>, %arg10: memref<1x1x128xf32, #tpu.memory_space<vmem>>, %arg11: memref<128x128xbf16, #tpu.memory_space<vmem>>, %arg12: memref<1x128xf32, #tpu.memory_space<vmem>>, %arg13: memref<8x128xf32, #tpu.memory_space<vmem>>, %arg14: memref<8x128xf32, #tpu.memory_space<vmem>>) attributes {dimension_semantics = [#tpu.dimension_semantics<arbitrary>], iteration_bounds = array<i64: 2>, scalar_prefetch = 0 : i64, scratch_operands = 1 : i64, tpu.core_type = #tpu.core_type<tc>, window_params = [{pipeline_mode = #tpu.pipeline_mode<synchronous>, transform_indices = @transform_0, window_bounds = array<i64: 8, 128>}, {pipeline_mode = #tpu.pipeline_mode<synchronous>, transform_indices = @transform_1, window_bounds = array<i64: 128, 128>}, {pipeline_mode = #tpu.pipeline_mode<synchronous>, transform_indices = @transform_2, window_bounds = array<i64: 1, 128>}, {transform_indices = @transform_3, window_bounds = array<i64: 1, 1, 128>}, {transform_indices = @transform_4, window_bounds = array<i64: 1, 1, 128>}, {transform_indices = @transform_5, window_bounds = array<i64: 1, 128, 128>}, {transform_indices = @transform_6, window_bounds = array<i64: 1, 1, 128>}, {transform_indices = @transform_7, window_bounds = array<i64: 1, 1, 128>}, {transform_indices = @transform_8, window_bounds = array<i64: 1, 128, 128>}, {transform_indices = @transform_9, window_bounds = array<i64: 1, 1, 128>}, {pipeline_mode = #tpu.pipeline_mode<synchronous>, transform_indices = @transform_10, window_bounds = array<i64: 128, 128>}, {pipeline_mode = #tpu.pipeline_mode<synchronous>, transform_indices = @transform_11, window_bounds = array<i64: 1, 128>}, {pipeline_mode = #tpu.pipeline_mode<synchronous>, transform_indices = @transform_12, window_bounds = array<i64: 8, 128>}]} {
    %c0_i32 = arith.constant 0 : i32
    %0 = arith.cmpi eq, %arg0, %c0_i32 : i32
    %1 = arith.extui %0 : i1 to i32
    %c0_i32_0 = arith.constant 0 : i32
    %2 = arith.cmpi ne, %1, %c0_i32_0 : i32
    scf.if %2 {
      %c0_39 = arith.constant 0 : index
      %c0_40 = arith.constant 0 : index
      %75 = vector.load %arg1[%c0_39, %c0_40] : memref<8x128xbf16, #tpu.memory_space<vmem>>, vector<8x128xbf16>
      %c0_41 = arith.constant 0 : index
      %c0_42 = arith.constant 0 : index
      %76 = vector.load %arg2[%c0_41, %c0_42] : memref<128x128xbf16, #tpu.memory_space<vmem>>, vector<128x128xbf16>
      %cst_43 = arith.constant dense<0.000000e+00> : vector<8x128xf32>
      %77 = tpu.matmul %75, %76, %cst_43 {dimension_numbers = #tpu.dot_dimension_numbers<[1], [0], [0], [1], [0, 0, 1, 1], [], []>} : vector<8x128xbf16>, vector<128x128xbf16>, vector<8x128xf32> -> vector<8x128xf32>
      %c0_44 = arith.constant 0 : index
      %c0_45 = arith.constant 0 : index
      %78 = vector.load %arg3[%c0_44, %c0_45] : memref<1x128xf32, #tpu.memory_space<vmem>>, vector<1x128xf32>
      %79 = vector.broadcast %78 : vector<1x128xf32> to vector<8x128xf32>
      %80 = arith.addf %77, %79 : vector<8x128xf32>
      %c0_46 = arith.constant 0 : index
      %c0_47 = arith.constant 0 : index
      %81 = vector.load %arg14[%c0_46, %c0_47] : memref<8x128xf32, #tpu.memory_space<vmem>>, vector<8x128xf32>
      tpu.vector_store %arg14[%c0_46, %c0_47], %80 {strides = array<i32>} : memref<8x128xf32, #tpu.memory_space<vmem>>, vector<8x128xf32>,
    } else {
    }
    %c0 = arith.constant 0 : index
    %c0_1 = arith.constant 0 : index
    %3 = vector.load %arg14[%c0, %c0_1] : memref<8x128xf32, #tpu.memory_space<vmem>>, vector<8x128xf32>
    %c0_2 = arith.constant 0 : index
    %c0_3 = arith.constant 0 : index
    %c0_4 = arith.constant 0 : index
    %4 = vector.load %arg4[%c0_2, %c0_3, %c0_4] : memref<1x1x128xf32, #tpu.memory_space<vmem>>, vector<1x1x128xf32>
    %5 = vector.shape_cast %4 : vector<1x1x128xf32> to vector<1x128xf32>
    %c0_5 = arith.constant 0 : index
    %c0_6 = arith.constant 0 : index
    %c0_7 = arith.constant 0 : index
    %6 = vector.load %arg5[%c0_5, %c0_6, %c0_7] : memref<1x1x128xf32, #tpu.memory_space<vmem>>, vector<1x1x128xf32>
    %7 = vector.shape_cast %6 : vector<1x1x128xf32> to vector<1x128xf32>
    %cst = arith.constant dense<0.000000e+00> : vector<128xf32>
    %8 = vector.multi_reduction <add>, %3, %cst [0] : vector<8x128xf32> to vector<128xf32>
    %9 = vector.shape_cast %8 : vector<128xf32> to vector<1x128xf32>
    %cst_8 = arith.constant 1.250000e-01 : f32
    %10 = vector.broadcast %cst_8 : f32 to vector<1x128xf32>
    %11 = arith.mulf %9, %10 : vector<1x128xf32>
    %12 = vector.broadcast %11 : vector<1x128xf32> to vector<8x128xf32>
    %13 = arith.subf %3, %12 : vector<8x128xf32>
    %14 = arith.mulf %13, %13 : vector<8x128xf32>
    %cst_9 = arith.constant dense<0.000000e+00> : vector<128xf32>
    %15 = vector.multi_reduction <add>, %14, %cst_9 [0] : vector<8x128xf32> to vector<128xf32>
    %16 = vector.shape_cast %15 : vector<128xf32> to vector<1x128xf32>
    %cst_10 = arith.constant 1.250000e-01 : f32
    %17 = vector.broadcast %cst_10 : f32 to vector<1x128xf32>
    %18 = arith.mulf %16, %17 : vector<1x128xf32>
    %cst_11 = arith.constant 9.99999974E-6 : f32
    %19 = vector.broadcast %cst_11 : f32 to vector<1x128xf32>
    %20 = arith.addf %18, %19 : vector<1x128xf32>
    %21 = math.rsqrt %20 : vector<1x128xf32>
    %22 = arith.mulf %21, %5 : vector<1x128xf32>
    %23 = arith.mulf %11, %22 : vector<1x128xf32>
    %24 = arith.subf %7, %23 : vector<1x128xf32>
    %25 = vector.broadcast %22 : vector<1x128xf32> to vector<8x128xf32>
    %26 = arith.mulf %3, %25 : vector<8x128xf32>
    %27 = vector.broadcast %24 : vector<1x128xf32> to vector<8x128xf32>
    %28 = arith.addf %26, %27 : vector<8x128xf32>
    %cst_12 = arith.constant 0.000000e+00 : f32
    %29 = vector.broadcast %cst_12 : f32 to vector<8x128xf32>
    %30 = arith.maximumf %28, %29 : vector<8x128xf32>
    %c0_13 = arith.constant 0 : index
    %c0_14 = arith.constant 0 : index
    %c0_15 = arith.constant 0 : index
    %31 = vector.load %arg6[%c0_13, %c0_14, %c0_15] : memref<1x128x128xbf16, #tpu.memory_space<vmem>>, vector<1x128x128xbf16>
    %32 = vector.shape_cast %31 : vector<1x128x128xbf16> to vector<128x128xbf16>
    %33 = arith.truncf %30 : vector<8x128xf32> to vector<8x128xbf16>
    %cst_16 = arith.constant dense<0.000000e+00> : vector<8x128xf32>
    %34 = tpu.matmul %33, %32, %cst_16 {dimension_numbers = #tpu.dot_dimension_numbers<[1], [0], [0], [1], [0, 0, 1, 1], [], []>} : vector<8x128xbf16>, vector<128x128xbf16>, vector<8x128xf32> -> vector<8x128xf32>
    %c0_17 = arith.constant 0 : index
    %c0_18 = arith.constant 0 : index
    %c0_19 = arith.constant 0 : index
    %35 = vector.load %arg7[%c0_17, %c0_18, %c0_19] : memref<1x1x128xf32, #tpu.memory_space<vmem>>, vector<1x1x128xf32>
    %36 = vector.shape_cast %35 : vector<1x1x128xf32> to vector<1x128xf32>
    %c0_20 = arith.constant 0 : index
    %c0_21 = arith.constant 0 : index
    %c0_22 = arith.constant 0 : index
    %37 = vector.load %arg8[%c0_20, %c0_21, %c0_22] : memref<1x1x128xf32, #tpu.memory_space<vmem>>, vector<1x1x128xf32>
    %38 = vector.shape_cast %37 : vector<1x1x128xf32> to vector<1x128xf32>
    %cst_23 = arith.constant dense<0.000000e+00> : vector<128xf32>
    %39 = vector.multi_reduction <add>, %34, %cst_23 [0] : vector<8x128xf32> to vector<128xf32>
    %40 = vector.shape_cast %39 : vector<128xf32> to vector<1x128xf32>
    %cst_24 = arith.constant 1.250000e-01 : f32
    %41 = vector.broadcast %cst_24 : f32 to vector<1x128xf32>
    %42 = arith.mulf %40, %41 : vector<1x128xf32>
    %43 = vector.broadcast %42 : vector<1x128xf32> to vector<8x128xf32>
    %44 = arith.subf %34, %43 : vector<8x128xf32>
    %45 = arith.mulf %44, %44 : vector<8x128xf32>
    %cst_25 = arith.constant dense<0.000000e+00> : vector<128xf32>
    %46 = vector.multi_reduction <add>, %45, %cst_25 [0] : vector<8x128xf32> to vector<128xf32>
    %47 = vector.shape_cast %46 : vector<128xf32> to vector<1x128xf32>
    %cst_26 = arith.constant 1.250000e-01 : f32
    %48 = vector.broadcast %cst_26 : f32 to vector<1x128xf32>
    %49 = arith.mulf %47, %48 : vector<1x128xf32>
    %cst_27 = arith.constant 9.99999974E-6 : f32
    %50 = vector.broadcast %cst_27 : f32 to vector<1x128xf32>
    %51 = arith.addf %49, %50 : vector<1x128xf32>
    %52 = math.rsqrt %51 : vector<1x128xf32>
    %53 = arith.mulf %52, %36 : vector<1x128xf32>
    %54 = arith.mulf %42, %53 : vector<1x128xf32>
    %55 = arith.subf %38, %54 : vector<1x128xf32>
    %56 = vector.broadcast %53 : vector<1x128xf32> to vector<8x128xf32>
    %57 = arith.mulf %34, %56 : vector<8x128xf32>
    %58 = vector.broadcast %55 : vector<1x128xf32> to vector<8x128xf32>
    %59 = arith.addf %57, %58 : vector<8x128xf32>
    %cst_28 = arith.constant 0.000000e+00 : f32
    %60 = vector.broadcast %cst_28 : f32 to vector<8x128xf32>
    %61 = arith.maximumf %59, %60 : vector<8x128xf32>
    %c0_29 = arith.constant 0 : index
    %c0_30 = arith.constant 0 : index
    %c0_31 = arith.constant 0 : index
    %62 = vector.load %arg9[%c0_29, %c0_30, %c0_31] : memref<1x128x128xbf16, #tpu.memory_space<vmem>>, vector<1x128x128xbf16>
    %63 = vector.shape_cast %62 : vector<1x128x128xbf16> to vector<128x128xbf16>
    %64 = arith.truncf %61 : vector<8x128xf32> to vector<8x128xbf16>
    %cst_32 = arith.constant dense<0.000000e+00> : vector<8x128xf32>
    %65 = tpu.matmul %64, %63, %cst_32 {dimension_numbers = #tpu.dot_dimension_numbers<[1], [0], [0], [1], [0, 0, 1, 1], [], []>} : vector<8x128xbf16>, vector<128x128xbf16>, vector<8x128xf32> -> vector<8x128xf32>
    %c0_33 = arith.constant 0 : index
    %c0_34 = arith.constant 0 : index
    %c0_35 = arith.constant 0 : index
    %66 = vector.load %arg10[%c0_33, %c0_34, %c0_35] : memref<1x1x128xf32, #tpu.memory_space<vmem>>, vector<1x1x128xf32>
    %67 = vector.shape_cast %66 : vector<1x1x128xf32> to vector<1x128xf32>
    %68 = vector.broadcast %67 : vector<1x128xf32> to vector<8x128xf32>
    %69 = arith.addf %65, %68 : vector<8x128xf32>
    %70 = arith.addf %3, %69 : vector<8x128xf32>
    %c0_36 = arith.constant 0 : index
    %c0_37 = arith.constant 0 : index
    %71 = vector.load %arg14[%c0_36, %c0_37] : memref<8x128xf32, #tpu.memory_space<vmem>>, vector<8x128xf32>
    tpu.vector_store %arg14[%c0_36, %c0_37], %70 {strides = array<i32>} : memref<8x128xf32, #tpu.memory_space<vmem>>, vector<8x128xf32>,
    %c1_i32 = arith.constant 1 : i32
    %72 = arith.cmpi eq, %arg0, %c1_i32 : i32
    %73 = arith.extui %72 : i1 to i32
    %c0_i32_38 = arith.constant 0 : i32
    %74 = arith.cmpi ne, %73, %c0_i32_38 : i32
    scf.if %74 {
      %c0_39 = arith.constant 0 : index
      %c0_40 = arith.constant 0 : index
      %75 = vector.load %arg11[%c0_39, %c0_40] : memref<128x128xbf16, #tpu.memory_space<vmem>>, vector<128x128xbf16>
      %76 = arith.truncf %70 : vector<8x128xf32> to vector<8x128xbf16>
      %cst_41 = arith.constant dense<0.000000e+00> : vector<8x128xf32>
      %77 = tpu.matmul %76, %75, %cst_41 {dimension_numbers = #tpu.dot_dimension_numbers<[1], [0], [0], [1], [0, 0, 1, 1], [], []>} : vector<8x128xbf16>, vector<128x128xbf16>, vector<8x128xf32> -> vector<8x128xf32>
      %c0_42 = arith.constant 0 : index
      %c0_43 = arith.constant 0 : index
      %78 = vector.load %arg12[%c0_42, %c0_43] : memref<1x128xf32, #tpu.memory_space<vmem>>, vector<1x128xf32>
      %79 = vector.broadcast %78 : vector<1x128xf32> to vector<8x128xf32>
      %80 = arith.addf %77, %79 : vector<8x128xf32>
      %c0_44 = arith.constant 0 : index
      %c0_45 = arith.constant 0 : index
      %81 = vector.load %arg13[%c0_44, %c0_45] : memref<8x128xf32, #tpu.memory_space<vmem>>, vector<8x128xf32>
      tpu.vector_store %arg13[%c0_44, %c0_45], %80 {strides = array<i32>} : memref<8x128xf32, #tpu.memory_space<vmem>>, vector<8x128xf32>,
    } else {
    }
    return
  }
  func.func @transform_0(%arg0: i32) -> (i32, i32) {
    %c0_i32 = arith.constant 0 : i32
    %c0_i32_0 = arith.constant 0 : i32
    %c0_i32_1 = arith.constant 0 : i32
    return %c0_i32, %c0_i32_0 : i32, i32
  }
  func.func @transform_1(%arg0: i32) -> (i32, i32) {
    %c0_i32 = arith.constant 0 : i32
    %c0_i32_0 = arith.constant 0 : i32
    %c0_i32_1 = arith.constant 0 : i32
    return %c0_i32, %c0_i32_0 : i32, i32
  }
  func.func @transform_2(%arg0: i32) -> (i32, i32) {
    %c0_i32 = arith.constant 0 : i32
    %c0_i32_0 = arith.constant 0 : i32
    %c0_i32_1 = arith.constant 0 : i32
    return %c0_i32, %c0_i32_0 : i32, i32
  }
  func.func @transform_3(%arg0: i32) -> (i32, i32, i32) {
    %c0_i32 = arith.constant 0 : i32
    %c0_i32_0 = arith.constant 0 : i32
    %c0_i32_1 = arith.constant 0 : i32
    return %arg0, %c0_i32, %c0_i32_0 : i32, i32, i32
  }
  func.func @transform_4(%arg0: i32) -> (i32, i32, i32) {
    %c0_i32 = arith.constant 0 : i32
    %c0_i32_0 = arith.constant 0 : i32
    %c0_i32_1 = arith.constant 0 : i32
    return %arg0, %c0_i32, %c0_i32_0 : i32, i32, i32
  }
  func.func @transform_5(%arg0: i32) -> (i32, i32, i32) {
    %c0_i32 = arith.constant 0 : i32
    %c0_i32_0 = arith.constant 0 : i32
    %c0_i32_1 = arith.constant 0 : i32
    return %arg0, %c0_i32, %c0_i32_0 : i32, i32, i32
  }
  func.func @transform_6(%arg0: i32) -> (i32, i32, i32) {
    %c0_i32 = arith.constant 0 : i32
    %c0_i32_0 = arith.constant 0 : i32
    %c0_i32_1 = arith.constant 0 : i32
    return %arg0, %c0_i32, %c0_i32_0 : i32, i32, i32
  }
  func.func @transform_7(%arg0: i32) -> (i32, i32, i32) {
    %c0_i32 = arith.constant 0 : i32
    %c0_i32_0 = arith.constant 0 : i32
    %c0_i32_1 = arith.constant 0 : i32
    return %arg0, %c0_i32, %c0_i32_0 : i32, i32, i32
  }
  func.func @transform_8(%arg0: i32) -> (i32, i32, i32) {
    %c0_i32 = arith.constant 0 : i32
    %c0_i32_0 = arith.constant 0 : i32
    %c0_i32_1 = arith.constant 0 : i32
    return %arg0, %c0_i32, %c0_i32_0 : i32, i32, i32
  }
  func.func @transform_9(%arg0: i32) -> (i32, i32, i32) {
    %c0_i32 = arith.constant 0 : i32
    %c0_i32_0 = arith.constant 0 : i32
    %c0_i32_1 = arith.constant 0 : i32
    return %arg0, %c0_i32, %c0_i32_0 : i32, i32, i32
  }
  func.func @transform_10(%arg0: i32) -> (i32, i32) {
    %c0_i32 = arith.constant 0 : i32
    %c0_i32_0 = arith.constant 0 : i32
    %c0_i32_1 = arith.constant 0 : i32
    return %c0_i32, %c0_i32_0 : i32, i32
  }
  func.func @transform_11(%arg0: i32) -> (i32, i32) {
    %c0_i32 = arith.constant 0 : i32
    %c0_i32_0 = arith.constant 0 : i32
    %c0_i32_1 = arith.constant 0 : i32
    return %c0_i32, %c0_i32_0 : i32, i32
  }
  func.func @transform_12(%arg0: i32) -> (i32, i32) {
    %c0_i32 = arith.constant 0 : i32
    %c0_i32_0 = arith.constant 0 : i32
    %c0_i32_1 = arith.constant 0 : i32
    return %c0_i32, %c0_i32_0 : i32, i32
  }
}

</mosaic_0001>

<llo_original>
// kernel: tpu_custom_call.1
$region0: #{tpu_custom_call.1}
  #allocation0 [shape = 'u32[]', space=smem, size = 0x4, offset = 0x4, fixed_abs, tag = 'smem constant byte address 0x4 - core index']
  #allocation1 [shape = 'u32[144,128]{1,0:T(1,128)}', space=vmem, size = 0x12000, scoped, tag = 'internal scratch']
  #allocation2 [shape = 'f32[8,128]{1,0:T(8,128)}', space=vmem, size = 0x1000, scoped, tag = 'scratch operand']
  %s0 = inlined_call_operand.hbm [shape: bf16[8,128], index: 0, kind: input, shape index: {}]
  %s1 = inlined_call_operand.hbm [shape: bf16[128,128], index: 1, kind: input, shape index: {}]
  %s2 = inlined_call_operand.vmem [shape: f32[1,128], index: 2, kind: input, shape index: {}]
  %s3 = inlined_call_operand.vmem [shape: f32[2,1,128], index: 3, kind: input, shape index: {}]
  %s4 = inlined_call_operand.vmem [shape: f32[2,1,128], index: 4, kind: input, shape index: {}]
  %s5 = inlined_call_operand.hbm [shape: bf16[2,128,128], index: 5, kind: input, shape index: {}]
  %s6 = inlined_call_operand.vmem [shape: f32[2,1,128], index: 6, kind: input, shape index: {}]
  %s7 = inlined_call_operand.vmem [shape: f32[2,1,128], index: 7, kind: input, shape index: {}]
  %s8 = inlined_call_operand.hbm [shape: bf16[2,128,128], index: 8, kind: input, shape index: {}]
  %s9 = inlined_call_operand.vmem [shape: f32[2,1,128], index: 9, kind: input, shape index: {}]
  %s10 = inlined_call_operand.hbm [shape: bf16[128,128], index: 10, kind: input, shape index: {}]
  %s11 = inlined_call_operand.vmem [shape: f32[1,128], index: 11, kind: input, shape index: {}]
  %s12 = inlined_call_operand.hbm [shape: f32[8,128], index: 12, kind: output, shape index: {}]
  %s13 = sld [smem:[#allocation0]]
  $region109: #{tpu_custom_call.1} parent=0
    _
  %s15 = ssub.s32 1, %s13
  %s16 = scalar_select 0, %s15, %s13
  $region1: #{tpu_custom_call.1} parent=0
    #allocation3 [shape = 'u8[2048]{0}', space=vmem, size = 0x800, scoped, tag = 'input window, operand 0, single buffered']
    #allocation4 [shape = 's32[2]{0}', space=sflag, size = 0x8, scoped, tag = 'scoped memory for tpu_custom_call.1']
    #allocation5 [shape = 's32[2]{0}', space=sflag, size = 0x8, scoped, tag = 'scoped memory for tpu_custom_call.1']
    #allocation6 [shape = 'u8[32768]{0}', space=vmem, size = 0x8000, scoped, tag = 'input window, operand 1, single buffered']
    #allocation7 [shape = 's32[1]{0}', space=sflag, size = 0x4, scoped, tag = 'scoped memory for tpu_custom_call.1']
    #allocation8 [shape = 'u8[65536]{0}', space=vmem, size = 0x10000, scoped, tag = 'input window, operand 5']
    #allocation9 [shape = 'u8[65536]{0}', space=vmem, size = 0x10000, scoped, tag = 'input window, operand 8']
    #allocation10 [shape = 'u8[32768]{0}', space=vmem, size = 0x8000, scoped, tag = 'input window, operand 10, single buffered']
    #allocation11 [shape = 'u8[4096]{0}', space=vmem, size = 0x1000, scoped, tag = 'output window, operand 0, single buffered']
    %17 = vsyncpa [#allocation4], 0
    %18 = vsyncpa [#allocation7], 0
    %19 = vsyncpa [#allocation5], 0
    loop: start=0, step=1, limit=4
    $region2: #{tpu_custom_call.1} parent=1 // loop_pre_header
      _
    $region3: #{tpu_custom_call.1} parent=1 // loop_header
      %s21 = sphi 0, %s25
      %p22 = scmp.ge.s32.totalorder %s21, 4
      %s29 = sphi 0, %s29
      %s31 = sphi 0, %s29
      %s32 = sphi 0, %s31
      %s46 = sphi 0, %s32
      %s50 = sphi 0, %s50
      %s52 = sphi 0, %s50
      %s53 = sphi 0, %s52
      %s67 = sphi 0, %s53
      %s71 = sphi 0, %s71
      %s73 = sphi 0, %s71
      %s74 = sphi 0, %s73
      %s88 = sphi 0, %s74
      %s94 = sphi 0, %s96
      %s97 = sphi 0, %s94
      %s98 = sphi 0, %s97
      %s114 = sphi 0, %s98
      %s120 = sphi 0, %s122
      %s123 = sphi 0, %s120
      %s124 = sphi 0, %s123
      %s140 = sphi 0, %s124
      %s146 = sphi 0, %s148
      %s149 = sphi 0, %s146
      %s150 = sphi 0, %s149
      %s166 = sphi 0, %s150
      %s172 = sphi 0, %s174
      %s175 = sphi 0, %s172
      %s176 = sphi 0, %s175
      %s192 = sphi 0, %s176
      %s198 = sphi 0, %s200
      %s201 = sphi 0, %s198
      %s202 = sphi 0, %s201
      %s218 = sphi 0, %s202
      %s224 = sphi 0, %s226
      %s227 = sphi 0, %s224
      %s228 = sphi 0, %s227
      %s244 = sphi 0, %s228
      %s250 = sphi 0, %s252
      %s253 = sphi 0, %s250
      %s254 = sphi 0, %s253
      %s270 = sphi 0, %s254
      %s274 = sphi 0, %s274
      %s276 = sphi 0, %s274
      %s277 = sphi 0, %s276
      %s291 = sphi 0, %s277
      %s295 = sphi 0, %s295
      %s297 = sphi 0, %s295
      %s298 = sphi 0, %s297
      %s312 = sphi 0, %s298
      %s316 = sphi 0, %s316
      %s318 = sphi 0, %s316
      %s319 = sphi 0, %s318
      %s333 = sphi 0, %s319
    $region4: #{tpu_custom_call.1} parent=1 // loop_header_branch
      %24 = sbr.rel (%p22) target = $region8
    $region5: #{tpu_custom_call.1} parent=1 // loop_body
      %s26 = ssub.s32 %s21, 1
      %s27 = ssub.s32 %s21, 2
      %s28 = sadd.s32 %s21, 1
      %s30 = sadd.s32 %s29, 1
      %p33 = scmp.eq.s32.totalorder %s21, 1
      %p34 = scmp.ne.s32.totalorder %s29, %s31
      %p35 = scmp.eq.s32.totalorder %s21, 0
      %p36 = por %p34, %p35
      %p37 = scmp.ne.s32.totalorder %s29, %s31
      %p38 = scmp.eq.s32.totalorder %s26, 1
      %p39 = por %p37, %p38
      %p40 = scmp.ne.s32.totalorder %s31, %s32
      %p41 = scmp.eq.s32.totalorder %s26, 0
      %p42 = por %p40, %p41
      %p43 = scmp.ne.s32.totalorder %s31, %s32
      %p44 = scmp.eq.s32.totalorder %s27, 1
      %p45 = por %p43, %p44
      %p47 = scmp.ne.s32.totalorder %s32, %s46
      %p48 = scmp.eq.s32.totalorder %s27, 0
      %p49 = por %p47, %p48
      %s51 = sadd.s32 %s50, 1
      %p54 = scmp.eq.s32.totalorder %s21, 1
      %p55 = scmp.ne.s32.totalorder %s50, %s52
      %p56 = scmp.eq.s32.totalorder %s21, 0
      %p57 = por %p55, %p56
      %p58 = scmp.ne.s32.totalorder %s50, %s52
      %p59 = scmp.eq.s32.totalorder %s26, 1
      %p60 = por %p58, %p59
      %p61 = scmp.ne.s32.totalorder %s52, %s53
      %p62 = scmp.eq.s32.totalorder %s26, 0
      %p63 = por %p61, %p62
      %p64 = scmp.ne.s32.totalorder %s52, %s53
      %p65 = scmp.eq.s32.totalorder %s27, 1
      %p66 = por %p64, %p65
      %p68 = scmp.ne.s32.totalorder %s53, %s67
      %p69 = scmp.eq.s32.totalorder %s27, 0
      %p70 = por %p68, %p69
      %s72 = sadd.s32 %s71, 1
      %p75 = scmp.eq.s32.totalorder %s21, 1
      %p76 = scmp.ne.s32.totalorder %s71, %s73
      %p77 = scmp.eq.s32.totalorder %s21, 0
      %p78 = por %p76, %p77
      %p79 = scmp.ne.s32.totalorder %s71, %s73
      %p80 = scmp.eq.s32.totalorder %s26, 1
      %p81 = por %p79, %p80
      %p82 = scmp.ne.s32.totalorder %s73, %s74
      %p83 = scmp.eq.s32.totalorder %s26, 0
      %p84 = por %p82, %p83
      %p85 = scmp.ne.s32.totalorder %s73, %s74
      %p86 = scmp.eq.s32.totalorder %s27, 1
      %p87 = por %p85, %p86
      %p89 = scmp.ne.s32.totalorder %s74, %s88
      %p90 = scmp.eq.s32.totalorder %s27, 0
      %p91 = por %p89, %p90
      %s92 = ssub.s32 %s21, %s28
      %p93 = scmp.eq.s32.totalorder %s92, 0
      %s95 = sadd.s32 %s94, 1
      %s96 = scalar_select %p93, %s94, %s95
      %p99 = pneg %p93
      %p100 = scmp.eq.s32.totalorder %s21, 1
      %p101 = por %p99, %p100
      %p102 = scmp.ne.s32.totalorder %s94, %s97
      %p103 = scmp.eq.s32.totalorder %s21, 0
      %p104 = por %p102, %p103
      %p105 = scmp.ne.s32.totalorder %s94, %s97
      %p106 = scmp.eq.s32.totalorder %s26, 1
      %p107 = por %p105, %p106
      %p108 = scmp.ne.s32.totalorder %s97, %s98
      %p109 = scmp.eq.s32.totalorder %s26, 0
      %p110 = por %p108, %p109
      %p111 = scmp.ne.s32.totalorder %s97, %s98
      %p112 = scmp.eq.s32.totalorder %s27, 1
      %p113 = por %p111, %p112
      %p115 = scmp.ne.s32.totalorder %s98, %s114
      %p116 = scmp.eq.s32.totalorder %s27, 0
      %p117 = por %p115, %p116
      %s118 = ssub.s32 %s21, %s28
      %p119 = scmp.eq.s32.totalorder %s118, 0
      %s121 = sadd.s32 %s120, 1
      %s122 = scalar_select %p119, %s120, %s121
      %p125 = pneg %p119
      %p126 = scmp.eq.s32.totalorder %s21, 1
      %p127 = por %p125, %p126
      %p128 = scmp.ne.s32.totalorder %s120, %s123
      %p129 = scmp.eq.s32.totalorder %s21, 0
      %p130 = por %p128, %p129
      %p131 = scmp.ne.s32.totalorder %s120, %s123
      %p132 = scmp.eq.s32.totalorder %s26, 1
      %p133 = por %p131, %p132
      %p134 = scmp.ne.s32.totalorder %s123, %s124
      %p135 = scmp.eq.s32.totalorder %s26, 0
      %p136 = por %p134, %p135
      %p137 = scmp.ne.s32.totalorder %s123, %s124
      %p138 = scmp.eq.s32.totalorder %s27, 1
      %p139 = por %p137, %p138
      %p141 = scmp.ne.s32.totalorder %s124, %s140
      %p142 = scmp.eq.s32.totalorder %s27, 0
      %p143 = por %p141, %p142
      %s144 = ssub.s32 %s21, %s28
      %p145 = scmp.eq.s32.totalorder %s144, 0
      %s147 = sadd.s32 %s146, 1
      %s148 = scalar_select %p145, %s146, %s147
      %p151 = pneg %p145
      %p152 = scmp.eq.s32.totalorder %s21, 1
      %p153 = por %p151, %p152
      %p154 = scmp.ne.s32.totalorder %s146, %s149
      %p155 = scmp.eq.s32.totalorder %s21, 0
      %p156 = por %p154, %p155
      %p157 = scmp.ne.s32.totalorder %s146, %s149
      %p158 = scmp.eq.s32.totalorder %s26, 1
      %p159 = por %p157, %p158
      %p160 = scmp.ne.s32.totalorder %s149, %s150
      %p161 = scmp.eq.s32.totalorder %s26, 0
      %p162 = por %p160, %p161
      %p163 = scmp.ne.s32.totalorder %s149, %s150
      %p164 = scmp.eq.s32.totalorder %s27, 1
      %p165 = por %p163, %p164
      %p167 = scmp.ne.s32.totalorder %s150, %s166
      %p168 = scmp.eq.s32.totalorder %s27, 0
      %p169 = por %p167, %p168
      %s170 = ssub.s32 %s21, %s28
      %p171 = scmp.eq.s32.totalorder %s170, 0
      %s173 = sadd.s32 %s172, 1
      %s174 = scalar_select %p171, %s172, %s173
      %p177 = pneg %p171
      %p178 = scmp.eq.s32.totalorder %s21, 1
      %p179 = por %p177, %p178
      %p180 = scmp.ne.s32.totalorder %s172, %s175
      %p181 = scmp.eq.s32.totalorder %s21, 0
      %p182 = por %p180, %p181
      %p183 = scmp.ne.s32.totalorder %s172, %s175
      %p184 = scmp.eq.s32.totalorder %s26, 1
      %p185 = por %p183, %p184
      %p186 = scmp.ne.s32.totalorder %s175, %s176
      %p187 = scmp.eq.s32.totalorder %s26, 0
      %p188 = por %p186, %p187
      %p189 = scmp.ne.s32.totalorder %s175, %s176
      %p190 = scmp.eq.s32.totalorder %s27, 1
      %p191 = por %p189, %p190
      %p193 = scmp.ne.s32.totalorder %s176, %s192
      %p194 = scmp.eq.s32.totalorder %s27, 0
      %p195 = por %p193, %p194
      %s196 = ssub.s32 %s21, %s28
      %p197 = scmp.eq.s32.totalorder %s196, 0
      %s199 = sadd.s32 %s198, 1
      %s200 = scalar_select %p197, %s198, %s199
      %p203 = pneg %p197
      %p204 = scmp.eq.s32.totalorder %s21, 1
      %p205 = por %p203, %p204
      %p206 = scmp.ne.s32.totalorder %s198, %s201
      %p207 = scmp.eq.s32.totalorder %s21, 0
      %p208 = por %p206, %p207
      %p209 = scmp.ne.s32.totalorder %s198, %s201
      %p210 = scmp.eq.s32.totalorder %s26, 1
      %p211 = por %p209, %p210
      %p212 = scmp.ne.s32.totalorder %s201, %s202
      %p213 = scmp.eq.s32.totalorder %s26, 0
      %p214 = por %p212, %p213
      %p215 = scmp.ne.s32.totalorder %s201, %s202
      %p216 = scmp.eq.s32.totalorder %s27, 1
      %p217 = por %p215, %p216
      %p219 = scmp.ne.s32.totalorder %s202, %s218
      %p220 = scmp.eq.s32.totalorder %s27, 0
      %p221 = por %p219, %p220
      %s222 = ssub.s32 %s21, %s28
      %p223 = scmp.eq.s32.totalorder %s222, 0
      %s225 = sadd.s32 %s224, 1
      %s226 = scalar_select %p223, %s224, %s225
      %p229 = pneg %p223
      %p230 = scmp.eq.s32.totalorder %s21, 1
      %p231 = por %p229, %p230
      %p232 = scmp.ne.s32.totalorder %s224, %s227
      %p233 = scmp.eq.s32.totalorder %s21, 0
      %p234 = por %p232, %p233
      %p235 = scmp.ne.s32.totalorder %s224, %s227
      %p236 = scmp.eq.s32.totalorder %s26, 1
      %p237 = por %p235, %p236
      %p238 = scmp.ne.s32.totalorder %s227, %s228
      %p239 = scmp.eq.s32.totalorder %s26, 0
      %p240 = por %p238, %p239
      %p241 = scmp.ne.s32.totalorder %s227, %s228
      %p242 = scmp.eq.s32.totalorder %s27, 1
      %p243 = por %p241, %p242
      %p245 = scmp.ne.s32.totalorder %s228, %s244
      %p246 = scmp.eq.s32.totalorder %s27, 0
      %p247 = por %p245, %p246
      %s248 = ssub.s32 %s21, %s28
      %p249 = scmp.eq.s32.totalorder %s248, 0
      %s251 = sadd.s32 %s250, 1
      %s252 = scalar_select %p249, %s250, %s251
      %p255 = pneg %p249
      %p256 = scmp.eq.s32.totalorder %s21, 1
      %p257 = por %p255, %p256
      %p258 = scmp.ne.s32.totalorder %s250, %s253
      %p259 = scmp.eq.s32.totalorder %s21, 0
      %p260 = por %p258, %p259
      %p261 = scmp.ne.s32.totalorder %s250, %s253
      %p262 = scmp.eq.s32.totalorder %s26, 1
      %p263 = por %p261, %p262
      %p264 = scmp.ne.s32.totalorder %s253, %s254
      %p265 = scmp.eq.s32.totalorder %s26, 0
      %p266 = por %p264, %p265
      %p267 = scmp.ne.s32.totalorder %s253, %s254
      %p268 = scmp.eq.s32.totalorder %s27, 1
      %p269 = por %p267, %p268
      %p271 = scmp.ne.s32.totalorder %s254, %s270
      %p272 = scmp.eq.s32.totalorder %s27, 0
      %p273 = por %p271, %p272
      %s275 = sadd.s32 %s274, 1
      %p278 = scmp.eq.s32.totalorder %s21, 1
      %p279 = scmp.ne.s32.totalorder %s274, %s276
      %p280 = scmp.eq.s32.totalorder %s21, 0
      %p281 = por %p279, %p280
      %p282 = scmp.ne.s32.totalorder %s274, %s276
      %p283 = scmp.eq.s32.totalorder %s26, 1
      %p284 = por %p282, %p283
      %p285 = scmp.ne.s32.totalorder %s276, %s277
      %p286 = scmp.eq.s32.totalorder %s26, 0
      %p287 = por %p285, %p286
      %p288 = scmp.ne.s32.totalorder %s276, %s277
      %p289 = scmp.eq.s32.totalorder %s27, 1
      %p290 = por %p288, %p289
      %p292 = scmp.ne.s32.totalorder %s277, %s291
      %p293 = scmp.eq.s32.totalorder %s27, 0
      %p294 = por %p292, %p293
      %s296 = sadd.s32 %s295, 1
      %p299 = scmp.eq.s32.totalorder %s21, 1
      %p300 = scmp.ne.s32.totalorder %s295, %s297
      %p301 = scmp.eq.s32.totalorder %s21, 0
      %p302 = por %p300, %p301
      %p303 = scmp.ne.s32.totalorder %s295, %s297
      %p304 = scmp.eq.s32.totalorder %s26, 1
      %p305 = por %p303, %p304
      %p306 = scmp.ne.s32.totalorder %s297, %s298
      %p307 = scmp.eq.s32.totalorder %s26, 0
      %p308 = por %p306, %p307
      %p309 = scmp.ne.s32.totalorder %s297, %s298
      %p310 = scmp.eq.s32.totalorder %s27, 1
      %p311 = por %p309, %p310
      %p313 = scmp.ne.s32.totalorder %s298, %s312
      %p314 = scmp.eq.s32.totalorder %s27, 0
      %p315 = por %p313, %p314
      %s317 = sadd.s32 %s316, 1
      %p320 = scmp.eq.s32.totalorder %s21, 1
      %p321 = scmp.ne.s32.totalorder %s316, %s318
      %p322 = scmp.eq.s32.totalorder %s21, 0
      %p323 = por %p321, %p322
      %p324 = scmp.ne.s32.totalorder %s316, %s318
      %p325 = scmp.eq.s32.totalorder %s26, 1
      %p326 = por %p324, %p325
      %p327 = scmp.ne.s32.totalorder %s318, %s319
      %p328 = scmp.eq.s32.totalorder %s26, 0
      %p329 = por %p327, %p328
      %p330 = scmp.ne.s32.totalorder %s318, %s319
      %p331 = scmp.eq.s32.totalorder %s27, 1
      %p332 = por %p330, %p331
      %p334 = scmp.ne.s32.totalorder %s319, %s333
      %p335 = scmp.eq.s32.totalorder %s27, 0
      %p336 = por %p334, %p335
      %p337 = scmp.le.s32.totalorder 1, %s21
      %p338 = scmp.lt.s32.totalorder %s21, 3
      %p339 = pnand %p337, %p338
      %p340 = pneg %p339
      // Predicated region
      $region9: #{tpu_custom_call.1} parent=5 // pred_check
        _
      $region10: #{tpu_custom_call.1} parent=5 // pred_check_branch
        %342 = sbr.rel (%p339) target = $region12
      $region11: #{tpu_custom_call.1} parent=5 // pred_region
        %s343 = ssub.s32 %s21, 1
        // Predicated region
        $region13: #{tpu_custom_call.1} parent=11 // pred_check
          %p344 = pneg %p42
        $region14: #{tpu_custom_call.1} parent=11 // pred_check_branch
          %346 = sbr.rel (%p344) target = $region16
        $region15: #{tpu_custom_call.1} parent=11 // pred_region
          %s348 = ssub.s32 64, 64
          %349 = vsyncadd [#allocation4], %s348
          %s351 = sshll.u32 [#allocation3], 4
          %s352 = int_to_ptr.vmem [resolvable:$true] %s351
          %354 = dma.hbm_to_vmem [thread:$0]  %s0, 64, %s352, [#allocation4]
        $region16: #{tpu_custom_call.1} parent=11 // pred_fallthru
          _
        // Predicated region
        $region17: #{tpu_custom_call.1} parent=11 // pred_check
          %p355 = pneg %p63
        $region18: #{tpu_custom_call.1} parent=11 // pred_check_branch
          %357 = sbr.rel (%p355) target = $region20
        $region19: #{tpu_custom_call.1} parent=11 // pred_region
          %s359 = ssub.s32 1024, 1024
          %360 = vsyncadd [#allocation7], %s359
          %s361 = sshll.u32 [#allocation6], 4
          %s362 = int_to_ptr.vmem [resolvable:$true] %s361
          %367 = dma.hbm_to_vmem [thread:$0]  %s1, 1024, %s362, [#allocation7], 64, 64, 4
        $region20: #{tpu_custom_call.1} parent=11 // pred_fallthru
          _
        // Predicated region
        $region21: #{tpu_custom_call.1} parent=11 // pred_check
          %p368 = pneg %p84
        $region22: #{tpu_custom_call.1} parent=11 // pred_check_branch
          %370 = sbr.rel (%p368) target = $region24
        $region23: #{tpu_custom_call.1} parent=11 // pred_region
          _
        $region24: #{tpu_custom_call.1} parent=11 // pred_fallthru
          _
        // Predicated region
        $region25: #{tpu_custom_call.1} parent=11 // pred_check
          %p371 = pneg %p287
        $region26: #{tpu_custom_call.1} parent=11 // pred_check_branch
          %373 = sbr.rel (%p371) target = $region28
        $region27: #{tpu_custom_call.1} parent=11 // pred_region
          %s375 = ssub.s32 1024, 1024
          %376 = vsyncadd [#allocation7], %s375
          %s377 = sshll.u32 [#allocation10], 4
          %s378 = int_to_ptr.vmem [resolvable:$true] %s377
          %383 = dma.hbm_to_vmem [thread:$0]  %s10, 1024, %s378, [#allocation7], 64, 64, 4
        $region28: #{tpu_custom_call.1} parent=11 // pred_fallthru
          _
        // Predicated region
        $region29: #{tpu_custom_call.1} parent=11 // pred_check
          %p384 = pneg %p308
        $region30: #{tpu_custom_call.1} parent=11 // pred_check_branch
          %386 = sbr.rel (%p384) target = $region32
        $region31: #{tpu_custom_call.1} parent=11 // pred_region
          _
        $region32: #{tpu_custom_call.1} parent=11 // pred_fallthru
          _
      $region12: #{tpu_custom_call.1} parent=5 // pred_fallthru
        _
      %p387 = scmp.lt.s32.totalorder %s21, 2
      // Predicated region
      $region33: #{tpu_custom_call.1} parent=5 // pred_check
        %p388 = pneg %p387
      $region34: #{tpu_custom_call.1} parent=5 // pred_check_branch
        %390 = sbr.rel (%p388) target = $region36
      $region35: #{tpu_custom_call.1} parent=5 // pred_region
        // Predicated region
        $region37: #{tpu_custom_call.1} parent=35 // pred_check
          %p391 = pneg %p104
        $region38: #{tpu_custom_call.1} parent=35 // pred_check_branch
          %393 = sbr.rel (%p391) target = $region40
        $region39: #{tpu_custom_call.1} parent=35 // pred_region
          %p394 = scmp.lt.s32.totalorder %s21, 1
          %s395 = scalar_select %p394, %s21, 1
          %s396 = scalar_lea.vmem %s3, %s395
        $region40: #{tpu_custom_call.1} parent=35 // pred_fallthru
          _
        // Predicated region
        $region41: #{tpu_custom_call.1} parent=35 // pred_check
          %p397 = pneg %p130
        $region42: #{tpu_custom_call.1} parent=35 // pred_check_branch
          %399 = sbr.rel (%p397) target = $region44
        $region43: #{tpu_custom_call.1} parent=35 // pred_region
          %p400 = scmp.lt.s32.totalorder %s21, 1
          %s401 = scalar_select %p400, %s21, 1
          %s402 = scalar_lea.vmem %s4, %s401
        $region44: #{tpu_custom_call.1} parent=35 // pred_fallthru
          _
        // Predicated region
        $region45: #{tpu_custom_call.1} parent=35 // pred_check
          %p403 = pneg %p156
        $region46: #{tpu_custom_call.1} parent=35 // pred_check_branch
          %405 = sbr.rel (%p403) target = $region48
        $region47: #{tpu_custom_call.1} parent=35 // pred_region
          %s406 = sand.u32 %s21, 1
          %s407 = scalar_lea.sflag [#allocation4], %s406
          %s408 = sand.u32 %s146, 1
          %s409 = smul.addr %s408, 64
          %s410 = scalar_lea.vmem [#allocation8], %s409
          %s412 = ssub.s32 1024, 1024
          %413 = vsyncadd %s407, %s412
          %s414 = smul.addr %s21, 16
          %s415 = smul.addr %s414, 64
          %s416 = scalar_lea.hbm %s5, %s415
          %s417 = sshll.u32 %s410, 4
          %s418 = int_to_ptr.vmem [resolvable:$true] %s417
          %423 = dma.hbm_to_vmem [thread:$0]  %s416, 1024, %s418, %s407, 64, 64, 4
        $region48: #{tpu_custom_call.1} parent=35 // pred_fallthru
          _
        // Predicated region
        $region49: #{tpu_custom_call.1} parent=35 // pred_check
          %p424 = pneg %p182
        $region50: #{tpu_custom_call.1} parent=35 // pred_check_branch
          %426 = sbr.rel (%p424) target = $region52
        $region51: #{tpu_custom_call.1} parent=35 // pred_region
          %p427 = scmp.lt.s32.totalorder %s21, 1
          %s428 = scalar_select %p427, %s21, 1
          %s429 = scalar_lea.vmem %s6, %s428
        $region52: #{tpu_custom_call.1} parent=35 // pred_fallthru
          _
        // Predicated region
        $region53: #{tpu_custom_call.1} parent=35 // pred_check
          %p430 = pneg %p208
        $region54: #{tpu_custom_call.1} parent=35 // pred_check_branch
          %432 = sbr.rel (%p430) target = $region56
        $region55: #{tpu_custom_call.1} parent=35 // pred_region
          %p433 = scmp.lt.s32.totalorder %s21, 1
          %s434 = scalar_select %p433, %s21, 1
          %s435 = scalar_lea.vmem %s7, %s434
        $region56: #{tpu_custom_call.1} parent=35 // pred_fallthru
          _
        // Predicated region
        $region57: #{tpu_custom_call.1} parent=35 // pred_check
          %p436 = pneg %p234
        $region58: #{tpu_custom_call.1} parent=35 // pred_check_branch
          %438 = sbr.rel (%p436) target = $region60
        $region59: #{tpu_custom_call.1} parent=35 // pred_region
          %s439 = sand.u32 %s21, 1
          %s440 = scalar_lea.sflag [#allocation4], %s439
          %s441 = sand.u32 %s224, 1
          %s442 = smul.addr %s441, 64
          %s443 = scalar_lea.vmem [#allocation9], %s442
          %s445 = ssub.s32 1024, 1024
          %446 = vsyncadd %s440, %s445
          %s447 = smul.addr %s21, 16
          %s448 = smul.addr %s447, 64
          %s449 = scalar_lea.hbm %s8, %s448
          %s450 = sshll.u32 %s443, 4
          %s451 = int_to_ptr.vmem [resolvable:$true] %s450
          %456 = dma.hbm_to_vmem [thread:$0]  %s449, 1024, %s451, %s440, 64, 64, 4
        $region60: #{tpu_custom_call.1} parent=35 // pred_fallthru
          _
        // Predicated region
        $region61: #{tpu_custom_call.1} parent=35 // pred_check
          %p457 = pneg %p260
        $region62: #{tpu_custom_call.1} parent=35 // pred_check_branch
          %459 = sbr.rel (%p457) target = $region64
        $region63: #{tpu_custom_call.1} parent=35 // pred_region
          %p460 = scmp.lt.s32.totalorder %s21, 1
          %s461 = scalar_select %p460, %s21, 1
          %s462 = scalar_lea.vmem %s9, %s461
        $region64: #{tpu_custom_call.1} parent=35 // pred_fallthru
          _
      $region36: #{tpu_custom_call.1} parent=5 // pred_fallthru
        _
      %p463 = scmp.le.s32.totalorder 1, %s21
      %p464 = scmp.lt.s32.totalorder %s21, 3
      %p465 = pnand %p463, %p464
      %p466 = pneg %p465
      // Predicated region
      $region65: #{tpu_custom_call.1} parent=5 // pred_check
        _
      $region66: #{tpu_custom_call.1} parent=5 // pred_check_branch
        %468 = sbr.rel (%p465) target = $region68
      $region67: #{tpu_custom_call.1} parent=5 // pred_region
        %s469 = ssub.s32 %s21, 1
        // Predicated region
        $region69: #{tpu_custom_call.1} parent=67 // pred_check
          %p470 = pneg %p42
        $region70: #{tpu_custom_call.1} parent=67 // pred_check_branch
          %472 = sbr.rel (%p470) target = $region72
        $region71: #{tpu_custom_call.1} parent=67 // pred_region
          %473 = dma.done [#allocation4], 64
        $region72: #{tpu_custom_call.1} parent=67 // pred_fallthru
          _
        // Predicated region
        $region73: #{tpu_custom_call.1} parent=67 // pred_check
          %p474 = pneg %p63
        $region74: #{tpu_custom_call.1} parent=67 // pred_check_branch
          %476 = sbr.rel (%p474) target = $region76
        $region75: #{tpu_custom_call.1} parent=67 // pred_region
          %477 = dma.done [#allocation7], 1024
        $region76: #{tpu_custom_call.1} parent=67 // pred_fallthru
          _
        %s478 = sand.u32 %s26, 1
        %s479 = scalar_lea.sflag [#allocation4], %s478
        %s480 = sand.u32 %s149, 1
        %s481 = smul.addr %s480, 64
        %s482 = scalar_lea.vmem [#allocation8], %s481
        // Predicated region
        $region77: #{tpu_custom_call.1} parent=67 // pred_check
          %p483 = pneg %p162
        $region78: #{tpu_custom_call.1} parent=67 // pred_check_branch
          %485 = sbr.rel (%p483) target = $region80
        $region79: #{tpu_custom_call.1} parent=67 // pred_region
          %486 = dma.done %s479, 1024
        $region80: #{tpu_custom_call.1} parent=67 // pred_fallthru
          _
        %s487 = sand.u32 %s26, 1
        %s488 = scalar_lea.sflag [#allocation4], %s487
        %s489 = sand.u32 %s227, 1
        %s490 = smul.addr %s489, 64
        %s491 = scalar_lea.vmem [#allocation9], %s490
        // Predicated region
        $region81: #{tpu_custom_call.1} parent=67 // pred_check
          %p492 = pneg %p240
        $region82: #{tpu_custom_call.1} parent=67 // pred_check_branch
          %494 = sbr.rel (%p492) target = $region84
        $region83: #{tpu_custom_call.1} parent=67 // pred_region
          %495 = dma.done %s488, 1024
        $region84: #{tpu_custom_call.1} parent=67 // pred_fallthru
          _
        // Predicated region
        $region85: #{tpu_custom_call.1} parent=67 // pred_check
          %p496 = pneg %p287
        $region86: #{tpu_custom_call.1} parent=67 // pred_check_branch
          %498 = sbr.rel (%p496) target = $region88
        $region87: #{tpu_custom_call.1} parent=67 // pred_region
          %499 = dma.done [#allocation7], 1024
        $region88: #{tpu_custom_call.1} parent=67 // pred_fallthru
          _
        %p500 = pneg %p42
        %p501 = pneg %p39
        %p502 = pneg %p63
        %p503 = pneg %p60
        %p504 = pneg %p84
        %p505 = pneg %p81
        %p506 = scmp.lt.s32.totalorder %s26, 1
        %s507 = scalar_select %p506, %s26, 1
        %s508 = scalar_lea.vmem %s3, %s507
        %p509 = pneg %p110
        %p510 = pneg %p107
        %p511 = scmp.lt.s32.totalorder %s26, 1
        %s512 = scalar_select %p511, %s26, 1
        %s513 = scalar_lea.vmem %s4, %s512
        %p514 = pneg %p136
        %p515 = pneg %p133
        %s516 = sand.u32 %s26, 1
        %s517 = scalar_lea.sflag [#allocation4], %s516
        %s518 = sand.u32 %s149, 1
        %s519 = smul.addr %s518, 64
        %s520 = scalar_lea.vmem [#allocation8], %s519
        %p521 = pneg %p162
        %p522 = pneg %p159
        %p523 = scmp.lt.s32.totalorder %s26, 1
        %s524 = scalar_select %p523, %s26, 1
        %s525 = scalar_lea.vmem %s6, %s524
        %p526 = pneg %p188
        %p527 = pneg %p185
        %p528 = scmp.lt.s32.totalorder %s26, 1
        %s529 = scalar_select %p528, %s26, 1
        %s530 = scalar_lea.vmem %s7, %s529
        %p531 = pneg %p214
        %p532 = pneg %p211
        %s533 = sand.u32 %s26, 1
        %s534 = scalar_lea.sflag [#allocation4], %s533
        %s535 = sand.u32 %s227, 1
        %s536 = smul.addr %s535, 64
        %s537 = scalar_lea.vmem [#allocation9], %s536
        %p538 = pneg %p240
        %p539 = pneg %p237
        %p540 = scmp.lt.s32.totalorder %s26, 1
        %s541 = scalar_select %p540, %s26, 1
        %s542 = scalar_lea.vmem %s9, %s541
        %p543 = pneg %p266
        %p544 = pneg %p263
        %p545 = pneg %p287
        %p546 = pneg %p284
        %p547 = pneg %p308
        %p548 = pneg %p305
        %p549 = pneg %p329
        %p550 = pneg %p326
        %p551 = scmp.lt.s32.totalorder %s26, 1
        %s552 = scalar_select %p551, %s26, 1
        %s553 = scalar_lea.vmem %s3, %s552
        %p554 = scmp.lt.s32.totalorder %s26, 1
        %s555 = scalar_select %p554, %s26, 1
        %s556 = scalar_lea.vmem %s4, %s555
        %p557 = scmp.lt.s32.totalorder %s26, 1
        %s558 = scalar_select %p557, %s26, 1
        %s559 = scalar_lea.vmem %s6, %s558
        %p560 = scmp.lt.s32.totalorder %s26, 1
        %s561 = scalar_select %p560, %s26, 1
        %s562 = scalar_lea.vmem %s7, %s561
        %p563 = scmp.lt.s32.totalorder %s26, 1
        %s564 = scalar_select %p563, %s26, 1
        %s565 = scalar_lea.vmem %s9, %s564
        %p567 = scmp.eq.s32.totalorder %s26, 0
        // Predicated region
        $region89: #{tpu_custom_call.1} parent=67 // pred_check
          %p568 = pneg %p567
        $region90: #{tpu_custom_call.1} parent=67 // pred_check_branch
          %570 = sbr.rel (%p568) target = $region92
        $region91: #{tpu_custom_call.1} parent=67 // pred_region
          %v571 = vld [vmem:[#allocation3] sm:$0xf]
          %v572 = vld [vmem:[#allocation6] sm:$0xf]
          %v573 = vld [vmem:[#allocation6 + $0x4] sm:$0xf]
          %v574 = vld [vmem:[#allocation6 + $0x8] sm:$0xf]
          %v575 = vld [vmem:[#allocation6 + $0xc] sm:$0xf]
          %v576 = vld [vmem:[#allocation6 + $0x10] sm:$0xf]
          %v577 = vld [vmem:[#allocation6 + $0x14] sm:$0xf]
          %v578 = vld [vmem:[#allocation6 + $0x18] sm:$0xf]
          %v579 = vld [vmem:[#allocation6 + $0x1c] sm:$0xf]
          %v580 = vld [vmem:[#allocation6 + $0x20] sm:$0xf]
          %v581 = vld [vmem:[#allocation6 + $0x24] sm:$0xf]
          %v582 = vld [vmem:[#allocation6 + $0x28] sm:$0xf]
          %v583 = vld [vmem:[#allocation6 + $0x2c] sm:$0xf]
          %v584 = vld [vmem:[#allocation6 + $0x30] sm:$0xf]
          %v585 = vld [vmem:[#allocation6 + $0x34] sm:$0xf]
          %v586 = vld [vmem:[#allocation6 + $0x38] sm:$0xf]
          %v587 = vld [vmem:[#allocation6 + $0x3c] sm:$0xf]
          %v588 = vld [vmem:[%s2] sm:$0x1]
          %v590 = vlaneseq
          %v591 = vshrl.u32 %v590, 7
          %v592 = vsub.s32 0, %v591
          %v593 = vrot.slane %v588, %v592
          %v611 = vunpack.c.l.b16 %v572
          %v612 = vunpack.c.l.b16 %v573
          %v613 = vunpack.c.l.b16 %v574
          %v614 = vunpack.c.l.b16 %v575
          %v615 = vunpack.c.l.b16 %v576
          %v616 = vunpack.c.l.b16 %v577
          %v617 = vunpack.c.l.b16 %v578
          %v618 = vunpack.c.l.b16 %v579
          %v619 = vunpack.c.l.b16 %v580
          %v620 = vunpack.c.l.b16 %v581
          %v621 = vunpack.c.l.b16 %v582
          %v622 = vunpack.c.l.b16 %v583
          %v623 = vunpack.c.l.b16 %v584
          %v624 = vunpack.c.l.b16 %v585
          %v625 = vunpack.c.l.b16 %v586
          %v626 = vunpack.c.l.b16 %v587
          %v627 = vpack.c.b16 %v612, %v611
          %v628 = vpack.c.b16 %v614, %v613
          %v629 = vpack.c.b16 %v616, %v615
          %v630 = vpack.c.b16 %v618, %v617
          %v631 = vpack.c.b16 %v620, %v619
          %v632 = vpack.c.b16 %v622, %v621
          %v633 = vpack.c.b16 %v624, %v623
          %v634 = vpack.c.b16 %v626, %v625
          %643 = vmatprep.subr.bf16.mxu0 0
          %644 = vmatpush1.bf16.msra.mxu0 %v627
          %645 = vmatprep.subr.bf16.mxu0 0
          %646 = vmatpush1.bf16.msra.mxu0 %v628
          %647 = vmatprep.subr.bf16.mxu0 0
          %648 = vmatpush1.bf16.msra.mxu0 %v629
          %649 = vmatprep.subr.bf16.mxu0 0
          %650 = vmatpush1.bf16.msra.mxu0 %v630
          %651 = vmatprep.subr.bf16.mxu0 0
          %652 = vmatpush1.bf16.msra.mxu0 %v631
          %653 = vmatprep.subr.bf16.mxu0 0
          %654 = vmatpush1.bf16.msra.mxu0 %v632
          %655 = vmatprep.subr.bf16.mxu0 0
          %656 = vmatpush1.bf16.msra.mxu0 %v633
          %657 = vmatprep.subr.bf16.mxu0 0
          %658 = vmatpush1.bf16.msra.mxu0 %v634
          %659 = vmatprep.subr.bf16.mxu0 0
          %660 = vmatpush1.bf16.msra.mxu0 0
          %661 = vmatprep.subr.bf16.mxu0 0
          %662 = vmatpush1.bf16.msra.mxu0 0
          %663 = vmatprep.subr.bf16.mxu0 0
          %664 = vmatpush1.bf16.msra.mxu0 0
          %665 = vmatprep.subr.bf16.mxu0 0
          %666 = vmatpush1.bf16.msra.mxu0 0
          %667 = vmatprep.subr.bf16.mxu0 0
          %668 = vmatpush1.bf16.msra.mxu0 0
          %669 = vmatprep.subr.bf16.mxu0 0
          %670 = vmatpush1.bf16.msra.mxu0 0
          %671 = vmatprep.subr.bf16.mxu0 0
          %672 = vmatpush1.bf16.msra.mxu0 0
          %673 = vmatprep.subr.bf16.mxu0 0
          %674 = vmatpush1.bf16.msra.mxu0 0
          %675 = vmatprep.mubr.bf16.mxu0 0
          %676 = vmatmul.mubr.bf16.gmra.mrb[0].mxu0 %v571
          %v677 = vpop.f32.mrb[0].mxu0
          %v678 = vadd.f32 %v593, %v677
          %v679 = vpop.f32.mrb[0].mxu0
          %v680 = vpop.f32.mrb[0].mxu0
          %v681 = vpop.f32.mrb[0].mxu0
          %682 = vdwg.mxu0
          %683 = vst [vmem:[#allocation2] sm:$0xff] %v678
        $region92: #{tpu_custom_call.1} parent=67 // pred_fallthru
          _
        %v684 = vld [vmem:[#allocation2] sm:$0xff]
        %v685 = vld [vmem:[%s553] sm:$0x1]
        %v686 = vld [vmem:[%s556] sm:$0x1]
        %v687 = vrot.slane %v684, 4
        %v688 = vadd.f32 %v684, %v687
        %v689 = vrot.slane %v688, 2
        %v690 = vadd.f32 %v688, %v689
        %v691 = vrot.slane %v690, 1
        %v692 = vadd.f32 %v690, %v691
        %v693 = vmul.f32 %v692, 0.125
        %v694 = vsub.f32 %v684, %v693
        %v695 = vmul.f32 %v694, %v694
        %v696 = vrot.slane %v695, 4
        %v697 = vadd.f32 %v695, %v696
        %v698 = vrot.slane %v697, 2
        %v699 = vadd.f32 %v697, %v698
        %v700 = vrot.slane %v699, 1
        %v701 = vadd.f32 %v699, %v700
        %v702 = vmul.f32 %v701, 0.125
        %v703 = vadd.f32 %v702, 1e-05
        %v704 = vrsqrt.pop %v703
        %v705 = vmul.f32 %v704, %v685
        %v706 = vmul.f32 %v693, %v705
        %v707 = vsub.f32 %v686, %v706
        %v708 = vlaneseq
        %v709 = vshrl.u32 %v708, 7
        %v710 = vsub.s32 0, %v709
        %v711 = vrot.slane %v705, %v710
        %v712 = vmul.f32 %v684, %v711
        %v714 = vlaneseq
        %v715 = vshrl.u32 %v714, 7
        %v716 = vsub.s32 0, %v715
        %v717 = vrot.slane %v707, %v716
        %v719 = vadd.f32 %v712, %v717
        %v720 = vmax.f32 %v719, 0.0
        %v721 = vld [vmem:[%s482] sm:$0xf]
        %v722 = vld [vmem:[%s482 + $0x4] sm:$0xf]
        %v723 = vld [vmem:[%s482 + $0x8] sm:$0xf]
        %v724 = vld [vmem:[%s482 + $0xc] sm:$0xf]
        %v725 = vld [vmem:[%s482 + $0x10] sm:$0xf]
        %v726 = vld [vmem:[%s482 + $0x14] sm:$0xf]
        %v727 = vld [vmem:[%s482 + $0x18] sm:$0xf]
        %v728 = vld [vmem:[%s482 + $0x1c] sm:$0xf]
        %v729 = vld [vmem:[%s482 + $0x20] sm:$0xf]
        %v730 = vld [vmem:[%s482 + $0x24] sm:$0xf]
        %v731 = vld [vmem:[%s482 + $0x28] sm:$0xf]
        %v732 = vld [vmem:[%s482 + $0x2c] sm:$0xf]
        %v733 = vld [vmem:[%s482 + $0x30] sm:$0xf]
        %v734 = vld [vmem:[%s482 + $0x34] sm:$0xf]
        %v735 = vld [vmem:[%s482 + $0x38] sm:$0xf]
        %v736 = vld [vmem:[%s482 + $0x3c] sm:$0xf]
        %v737 = vpack.c.bf16 %v720, %v720
        %v754 = vunpack.c.l.b16 %v721
        %v755 = vunpack.c.l.b16 %v722
        %v756 = vunpack.c.l.b16 %v723
        %v757 = vunpack.c.l.b16 %v724
        %v758 = vunpack.c.l.b16 %v725
        %v759 = vunpack.c.l.b16 %v726
        %v760 = vunpack.c.l.b16 %v727
        %v761 = vunpack.c.l.b16 %v728
        %v762 = vunpack.c.l.b16 %v729
        %v763 = vunpack.c.l.b16 %v730
        %v764 = vunpack.c.l.b16 %v731
        %v765 = vunpack.c.l.b16 %v732
        %v766 = vunpack.c.l.b16 %v733
        %v767 = vunpack.c.l.b16 %v734
        %v768 = vunpack.c.l.b16 %v735
        %v769 = vunpack.c.l.b16 %v736
        %v770 = vpack.c.b16 %v755, %v754
        %v771 = vpack.c.b16 %v757, %v756
        %v772 = vpack.c.b16 %v759, %v758
        %v773 = vpack.c.b16 %v761, %v760
        %v774 = vpack.c.b16 %v763, %v762
        %v775 = vpack.c.b16 %v765, %v764
        %v776 = vpack.c.b16 %v767, %v766
        %v777 = vpack.c.b16 %v769, %v768
        %786 = vmatprep.subr.bf16.mxu0 0
        %787 = vmatpush1.bf16.msra.mxu0 %v770
        %788 = vmatprep.subr.bf16.mxu0 0
        %789 = vmatpush1.bf16.msra.mxu0 %v771
        %790 = vmatprep.subr.bf16.mxu0 0
        %791 = vmatpush1.bf16.msra.mxu0 %v772
        %792 = vmatprep.subr.bf16.mxu0 0
        %793 = vmatpush1.bf16.msra.mxu0 %v773
        %794 = vmatprep.subr.bf16.mxu0 0
        %795 = vmatpush1.bf16.msra.mxu0 %v774
        %796 = vmatprep.subr.bf16.mxu0 0
        %797 = vmatpush1.bf16.msra.mxu0 %v775
        %798 = vmatprep.subr.bf16.mxu0 0
        %799 = vmatpush1.bf16.msra.mxu0 %v776
        %800 = vmatprep.subr.bf16.mxu0 0
        %801 = vmatpush1.bf16.msra.mxu0 %v777
        %802 = vmatprep.subr.bf16.mxu0 0
        %803 = vmatpush1.bf16.msra.mxu0 0
        %804 = vmatprep.subr.bf16.mxu0 0
        %805 = vmatpush1.bf16.msra.mxu0 0
        %806 = vmatprep.subr.bf16.mxu0 0
        %807 = vmatpush1.bf16.msra.mxu0 0
        %808 = vmatprep.subr.bf16.mxu0 0
        %809 = vmatpush1.bf16.msra.mxu0 0
        %810 = vmatprep.subr.bf16.mxu0 0
        %811 = vmatpush1.bf16.msra.mxu0 0
        %812 = vmatprep.subr.bf16.mxu0 0
        %813 = vmatpush1.bf16.msra.mxu0 0
        %814 = vmatprep.subr.bf16.mxu0 0
        %815 = vmatpush1.bf16.msra.mxu0 0
        %816 = vmatprep.subr.bf16.mxu0 0
        %817 = vmatpush1.bf16.msra.mxu0 0
        %818 = vmatprep.mubr.bf16.mxu0 0
        %819 = vmatmul.mubr.bf16.gmra.mrb[0].mxu0 %v737
        %v820 = vpop.f32.mrb[0].mxu0
        %v821 = vadd.f32 0.0, %v820
        %v822 = vpop.f32.mrb[0].mxu0
        %v823 = vpop.f32.mrb[0].mxu0
        %v824 = vpop.f32.mrb[0].mxu0
        %825 = vdwg.mxu0
        %v826 = vld [vmem:[%s559] sm:$0x1]
        %v827 = vld [vmem:[%s562] sm:$0x1]
        %v828 = vrot.slane %v821, 4
        %v829 = vadd.f32 %v821, %v828
        %v830 = vrot.slane %v829, 2
        %v831 = vadd.f32 %v829, %v830
        %v832 = vrot.slane %v831, 1
        %v833 = vadd.f32 %v831, %v832
        %v834 = vmul.f32 %v833, 0.125
        %v835 = vsub.f32 %v821, %v834
        %v836 = vmul.f32 %v835, %v835
        %v837 = vrot.slane %v836, 4
        %v838 = vadd.f32 %v836, %v837
        %v839 = vrot.slane %v838, 2
        %v840 = vadd.f32 %v838, %v839
        %v841 = vrot.slane %v840, 1
        %v842 = vadd.f32 %v840, %v841
        %v843 = vmul.f32 %v842, 0.125
        %v844 = vadd.f32 %v843, 1e-05
        %v845 = vrsqrt.pop %v844
        %v846 = vmul.f32 %v845, %v826
        %v847 = vmul.f32 %v834, %v846
        %v848 = vsub.f32 %v827, %v847
        %v849 = vlaneseq
        %v850 = vshrl.u32 %v849, 7
        %v851 = vsub.s32 0, %v850
        %v852 = vrot.slane %v846, %v851
        %v853 = vmul.f32 %v821, %v852
        %v855 = vlaneseq
        %v856 = vshrl.u32 %v855, 7
        %v857 = vsub.s32 0, %v856
        %v858 = vrot.slane %v848, %v857
        %v860 = vadd.f32 %v853, %v858
        %v861 = vmax.f32 %v860, 0.0
        %v862 = vld [vmem:[%s491] sm:$0xf]
        %v863 = vld [vmem:[%s491 + $0x4] sm:$0xf]
        %v864 = vld [vmem:[%s491 + $0x8] sm:$0xf]
        %v865 = vld [vmem:[%s491 + $0xc] sm:$0xf]
        %v866 = vld [vmem:[%s491 + $0x10] sm:$0xf]
        %v867 = vld [vmem:[%s491 + $0x14] sm:$0xf]
        %v868 = vld [vmem:[%s491 + $0x18] sm:$0xf]
        %v869 = vld [vmem:[%s491 + $0x1c] sm:$0xf]
        %v870 = vld [vmem:[%s491 + $0x20] sm:$0xf]
        %v871 = vld [vmem:[%s491 + $0x24] sm:$0xf]
        %v872 = vld [vmem:[%s491 + $0x28] sm:$0xf]
        %v873 = vld [vmem:[%s491 + $0x2c] sm:$0xf]
        %v874 = vld [vmem:[%s491 + $0x30] sm:$0xf]
        %v875 = vld [vmem:[%s491 + $0x34] sm:$0xf]
        %v876 = vld [vmem:[%s491 + $0x38] sm:$0xf]
        %v877 = vld [vmem:[%s491 + $0x3c] sm:$0xf]
        %v878 = vpack.c.bf16 %v861, %v861
        %v879 = vld [vmem:[%s565] sm:$0x1]
        %v881 = vlaneseq
        %v882 = vshrl.u32 %v881, 7
        %v883 = vsub.s32 0, %v882
        %v884 = vrot.slane %v879, %v883
        %v902 = vunpack.c.l.b16 %v862
        %v903 = vunpack.c.l.b16 %v863
        %v904 = vunpack.c.l.b16 %v864
        %v905 = vunpack.c.l.b16 %v865
        %v906 = vunpack.c.l.b16 %v866
        %v907 = vunpack.c.l.b16 %v867
        %v908 = vunpack.c.l.b16 %v868
        %v909 = vunpack.c.l.b16 %v869
        %v910 = vunpack.c.l.b16 %v870
        %v911 = vunpack.c.l.b16 %v871
        %v912 = vunpack.c.l.b16 %v872
        %v913 = vunpack.c.l.b16 %v873
        %v914 = vunpack.c.l.b16 %v874
        %v915 = vunpack.c.l.b16 %v875
        %v916 = vunpack.c.l.b16 %v876
        %v917 = vunpack.c.l.b16 %v877
        %v918 = vpack.c.b16 %v903, %v902
        %v919 = vpack.c.b16 %v905, %v904
        %v920 = vpack.c.b16 %v907, %v906
        %v921 = vpack.c.b16 %v909, %v908
        %v922 = vpack.c.b16 %v911, %v910
        %v923 = vpack.c.b16 %v913, %v912
        %v924 = vpack.c.b16 %v915, %v914
        %v925 = vpack.c.b16 %v917, %v916
        %934 = vmatprep.subr.bf16.mxu0 0
        %935 = vmatpush1.bf16.msra.mxu0 %v918
        %936 = vmatprep.subr.bf16.mxu0 0
        %937 = vmatpush1.bf16.msra.mxu0 %v919
        %938 = vmatprep.subr.bf16.mxu0 0
        %939 = vmatpush1.bf16.msra.mxu0 %v920
        %940 = vmatprep.subr.bf16.mxu0 0
        %941 = vmatpush1.bf16.msra.mxu0 %v921
        %942 = vmatprep.subr.bf16.mxu0 0
        %943 = vmatpush1.bf16.msra.mxu0 %v922
        %944 = vmatprep.subr.bf16.mxu0 0
        %945 = vmatpush1.bf16.msra.mxu0 %v923
        %946 = vmatprep.subr.bf16.mxu0 0
        %947 = vmatpush1.bf16.msra.mxu0 %v924
        %948 = vmatprep.subr.bf16.mxu0 0
        %949 = vmatpush1.bf16.msra.mxu0 %v925
        %950 = vmatprep.subr.bf16.mxu0 0
        %951 = vmatpush1.bf16.msra.mxu0 0
        %952 = vmatprep.subr.bf16.mxu0 0
        %953 = vmatpush1.bf16.msra.mxu0 0
        %954 = vmatprep.subr.bf16.mxu0 0
        %955 = vmatpush1.bf16.msra.mxu0 0
        %956 = vmatprep.subr.bf16.mxu0 0
        %957 = vmatpush1.bf16.msra.mxu0 0
        %958 = vmatprep.subr.bf16.mxu0 0
        %959 = vmatpush1.bf16.msra.mxu0 0
        %960 = vmatprep.subr.bf16.mxu0 0
        %961 = vmatpush1.bf16.msra.mxu0 0
        %962 = vmatprep.subr.bf16.mxu0 0
        %963 = vmatpush1.bf16.msra.mxu0 0
        %964 = vmatprep.subr.bf16.mxu0 0
        %965 = vmatpush1.bf16.msra.mxu0 0
        %966 = vmatprep.mubr.bf16.mxu0 0
        %967 = vmatmul.mubr.bf16.gmra.mrb[0].mxu0 %v878
        %v968 = vpop.f32.mrb[0].mxu0
        %v969 = vadd.f32 %v884, %v968
        %v970 = vpop.f32.mrb[0].mxu0
        %v971 = vpop.f32.mrb[0].mxu0
        %v972 = vpop.f32.mrb[0].mxu0
        %973 = vdwg.mxu0
        %v974 = vadd.f32 %v684, %v969
        %975 = vst [vmem:[#allocation2] sm:$0xff] %v974
        %p976 = scmp.eq.s32.totalorder %s26, 1
        // Predicated region
        $region93: #{tpu_custom_call.1} parent=67 // pred_check
          %p977 = pneg %p976
        $region94: #{tpu_custom_call.1} parent=67 // pred_check_branch
          %979 = sbr.rel (%p977) target = $region96
        $region95: #{tpu_custom_call.1} parent=67 // pred_region
          %v980 = vld [vmem:[#allocation10] sm:$0xf]
          %v981 = vld [vmem:[#allocation10 + $0x4] sm:$0xf]
          %v982 = vld [vmem:[#allocation10 + $0x8] sm:$0xf]
          %v983 = vld [vmem:[#allocation10 + $0xc] sm:$0xf]
          %v984 = vld [vmem:[#allocation10 + $0x10] sm:$0xf]
          %v985 = vld [vmem:[#allocation10 + $0x14] sm:$0xf]
          %v986 = vld [vmem:[#allocation10 + $0x18] sm:$0xf]
          %v987 = vld [vmem:[#allocation10 + $0x1c] sm:$0xf]
          %v988 = vld [vmem:[#allocation10 + $0x20] sm:$0xf]
          %v989 = vld [vmem:[#allocation10 + $0x24] sm:$0xf]
          %v990 = vld [vmem:[#allocation10 + $0x28] sm:$0xf]
          %v991 = vld [vmem:[#allocation10 + $0x2c] sm:$0xf]
          %v992 = vld [vmem:[#allocation10 + $0x30] sm:$0xf]
          %v993 = vld [vmem:[#allocation10 + $0x34] sm:$0xf]
          %v994 = vld [vmem:[#allocation10 + $0x38] sm:$0xf]
          %v995 = vld [vmem:[#allocation10 + $0x3c] sm:$0xf]
          %v996 = vpack.c.bf16 %v974, %v974
          %v997 = vld [vmem:[%s11] sm:$0x1]
          %v999 = vlaneseq
          %v1000 = vshrl.u32 %v999, 7
          %v1001 = vsub.s32 0, %v1000
          %v1002 = vrot.slane %v997, %v1001
          %v1020 = vunpack.c.l.b16 %v980
          %v1021 = vunpack.c.l.b16 %v981
          %v1022 = vunpack.c.l.b16 %v982
          %v1023 = vunpack.c.l.b16 %v983
          %v1024 = vunpack.c.l.b16 %v984
          %v1025 = vunpack.c.l.b16 %v985
          %v1026 = vunpack.c.l.b16 %v986
          %v1027 = vunpack.c.l.b16 %v987
          %v1028 = vunpack.c.l.b16 %v988
          %v1029 = vunpack.c.l.b16 %v989
          %v1030 = vunpack.c.l.b16 %v990
          %v1031 = vunpack.c.l.b16 %v991
          %v1032 = vunpack.c.l.b16 %v992
          %v1033 = vunpack.c.l.b16 %v993
          %v1034 = vunpack.c.l.b16 %v994
          %v1035 = vunpack.c.l.b16 %v995
          %v1036 = vpack.c.b16 %v1021, %v1020
          %v1037 = vpack.c.b16 %v1023, %v1022
          %v1038 = vpack.c.b16 %v1025, %v1024
          %v1039 = vpack.c.b16 %v1027, %v1026
          %v1040 = vpack.c.b16 %v1029, %v1028
          %v1041 = vpack.c.b16 %v1031, %v1030
          %v1042 = vpack.c.b16 %v1033, %v1032
          %v1043 = vpack.c.b16 %v1035, %v1034
          %1052 = vmatprep.subr.bf16.mxu0 0
          %1053 = vmatpush1.bf16.msra.mxu0 %v1036
          %1054 = vmatprep.subr.bf16.mxu0 0
          %1055 = vmatpush1.bf16.msra.mxu0 %v1037
          %1056 = vmatprep.subr.bf16.mxu0 0
          %1057 = vmatpush1.bf16.msra.mxu0 %v1038
          %1058 = vmatprep.subr.bf16.mxu0 0
          %1059 = vmatpush1.bf16.msra.mxu0 %v1039
          %1060 = vmatprep.subr.bf16.mxu0 0
          %1061 = vmatpush1.bf16.msra.mxu0 %v1040
          %1062 = vmatprep.subr.bf16.mxu0 0
          %1063 = vmatpush1.bf16.msra.mxu0 %v1041
          %1064 = vmatprep.subr.bf16.mxu0 0
          %1065 = vmatpush1.bf16.msra.mxu0 %v1042
          %1066 = vmatprep.subr.bf16.mxu0 0
          %1067 = vmatpush1.bf16.msra.mxu0 %v1043
          %1068 = vmatprep.subr.bf16.mxu0 0
          %1069 = vmatpush1.bf16.msra.mxu0 0
          %1070 = vmatprep.subr.bf16.mxu0 0
          %1071 = vmatpush1.bf16.msra.mxu0 0
          %1072 = vmatprep.subr.bf16.mxu0 0
          %1073 = vmatpush1.bf16.msra.mxu0 0
          %1074 = vmatprep.subr.bf16.mxu0 0
          %1075 = vmatpush1.bf16.msra.mxu0 0
          %1076 = vmatprep.subr.bf16.mxu0 0
          %1077 = vmatpush1.bf16.msra.mxu0 0
          %1078 = vmatprep.subr.bf16.mxu0 0
          %1079 = vmatpush1.bf16.msra.mxu0 0
          %1080 = vmatprep.subr.bf16.mxu0 0
          %1081 = vmatpush1.bf16.msra.mxu0 0
          %1082 = vmatprep.subr.bf16.mxu0 0
          %1083 = vmatpush1.bf16.msra.mxu0 0
          %1084 = vmatprep.mubr.bf16.mxu0 0
          %1085 = vmatmul.mubr.bf16.gmra.mrb[0].mxu0 %v996
          %v1086 = vpop.f32.mrb[0].mxu0
          %v1087 = vadd.f32 %v1002, %v1086
          %v1088 = vpop.f32.mrb[0].mxu0
          %v1089 = vpop.f32.mrb[0].mxu0
          %v1090 = vpop.f32.mrb[0].mxu0
          %1091 = vdwg.mxu0
          %1092 = vst [vmem:[#allocation11] sm:$0xff] %v1087
        $region96: #{tpu_custom_call.1} parent=67 // pred_fallthru
          _
        // Predicated region
        $region97: #{tpu_custom_call.1} parent=67 // pred_check
          %p1093 = pneg %p326
        $region98: #{tpu_custom_call.1} parent=67 // pred_check_branch
          %1095 = sbr.rel (%p1093) target = $region100
        $region99: #{tpu_custom_call.1} parent=67 // pred_region
          %s1097 = ssub.s32 128, 128
          %1098 = vsyncadd [#allocation5], %s1097
          %s1100 = sshll.u32 [#allocation11], 4
          %s1101 = int_to_ptr.vmem [resolvable:$true] %s1100
          %1103 = dma.vmem_to_hbm [thread:$0]  %s1101, 128, %s12, [#allocation5]
        $region100: #{tpu_custom_call.1} parent=67 // pred_fallthru
          _
        // Predicated region
        $region101: #{tpu_custom_call.1} parent=67 // pred_check
          %p1104 = pneg %p326
        $region102: #{tpu_custom_call.1} parent=67 // pred_check_branch
          %1106 = sbr.rel (%p1104) target = $region104
        $region103: #{tpu_custom_call.1} parent=67 // pred_region
          %1107 = dma.done [#allocation5], 128
        $region104: #{tpu_custom_call.1} parent=67 // pred_fallthru
          _
      $region68: #{tpu_custom_call.1} parent=5 // pred_fallthru
        _
      %p1108 = scmp.le.s32.totalorder 2, %s21
      // Predicated region
      $region105: #{tpu_custom_call.1} parent=5 // pred_check
        %p1109 = pneg %p1108
      $region106: #{tpu_custom_call.1} parent=5 // pred_check_branch
        %1111 = sbr.rel (%p1109) target = $region108
      $region107: #{tpu_custom_call.1} parent=5 // pred_region
        %s1112 = ssub.s32 %s21, 2
      $region108: #{tpu_custom_call.1} parent=5 // pred_fallthru
        _
    $region6: #{tpu_custom_call.1} parent=1 // loop_footer
      %s25 = sadd.s32 1, %s21
    $region7: #{tpu_custom_call.1} parent=1 // loop_footer_branch
      %20 = sbr.rel target = $region3
    $region8: #{tpu_custom_call.1} parent=1 // loop_exit
      _
    %1113 = vsyncpa [#allocation4], 1
    %s1114 = scalar_lea.sflag [#allocation4], 1
    %1115 = vsyncpa %s1114, 1
    %1116 = vsyncpa [#allocation7], 1
    %1117 = vsyncpa [#allocation5], 1
    %s1118 = scalar_lea.sflag [#allocation5], 1
    %1119 = vsyncpa %s1118, 1

</llo_original>
